<compile_context>
chip_gen: v5e
topology: v5e:2x2
jax: 0.10.0
libtpu: 0.0.40
codegen_flags: <defaults>
</compile_context>

<pallas_src>
import jax
import jax.numpy as jnp
from jax.experimental import pallas as pl
from jax.experimental.pallas import tpu as pltpu


def _feature_kernel(x_ref, w1_ref, b1_ref, w2_ref, b2_ref, w3_ref, b3_ref,
                    o_ref):
    # layer 1: (TB, D_in)bf16 @ (D_in, H)bf16 -> f32 acc, f32 bias + ReLU on VPU
    h1 = jnp.dot(x_ref[...], w1_ref[...],
                 preferred_element_type=jnp.float32) + b1_ref[...]
    h1 = jnp.maximum(h1, 0.0)
    # layer 2: re-quantize the activation to bf16 for the MXU, accumulate in f32
    h2 = jnp.dot(h1.astype(w2_ref.dtype), w2_ref[...],
                 preferred_element_type=jnp.float32) + b2_ref[...]
    h2 = jnp.maximum(h2, 0.0)
    # layer 3: lane-dense (padded to 128-multiple) output columns
    out = jnp.dot(h2.astype(w3_ref.dtype), w3_ref[...],
                  preferred_element_type=jnp.float32) + b3_ref[...]
    o_ref[...] = out.astype(o_ref.dtype)


def _round_up(x, m):
    return (x + m - 1) // m * m


@jax.jit
def feature_forward(x, w1, b1, w2, b2, w3, b3):
    batch, in_dim = x.shape
    out_dim = w3.shape[1]

    # ---- lane-dense output: zero-pad last layer to a multiple of 128 columns ----
    out_pad = _round_up(out_dim, 128)
    if out_pad != out_dim:
        w3 = jnp.pad(w3, ((0, 0), (0, out_pad - out_dim)))
        b3 = jnp.pad(b3, ((0, 0), (0, out_pad - out_dim)))

    # ---- batch tiling: 128-256 rows per grid step (keeps vreg pressure safe) ----
    tb = 256 if batch >= 256 else 128
    batch_pad = _round_up(batch, tb)
    if batch_pad != batch:
        x = jnp.pad(x, ((0, batch_pad - batch), (0, 0)))

    # bf16 operands for the MXU; biases stay f32 (accumulation is f32 in-kernel).
    xb = x.astype(jnp.bfloat16)
    w1b = w1.astype(jnp.bfloat16)
    w2b = w2.astype(jnp.bfloat16)
    w3b = w3.astype(jnp.bfloat16)
    b1f = b1.astype(jnp.float32)
    b2f = b2.astype(jnp.float32)
    b3f = b3.astype(jnp.float32)

    # Weights/biases: constant index_map -> fetched once, VMEM-resident across tiles.
    def resident(arr):
        return pl.BlockSpec(arr.shape, lambda i: (0,) * arr.ndim)

    out = pl.pallas_call(
        _feature_kernel,
        out_shape=jax.ShapeDtypeStruct((batch_pad, out_pad), jnp.float32),
        grid=(batch_pad // tb,),
        in_specs=[
            pl.BlockSpec((tb, in_dim), lambda i: (i, 0)),   # x: tiled over batch
            resident(w1b), resident(b1f),
            resident(w2b), resident(b2f),
            resident(w3b), resident(b3f),
        ],
        out_specs=pl.BlockSpec((tb, out_pad), lambda i: (i, 0)),
        compiler_params=pltpu.CompilerParams(
            dimension_semantics=("parallel",),   # megacore batch sharding on v7x
            vmem_limit_bytes=64 << 20,
        ),
    )(xb, w1b, b1f, w2b, b2f, w3b, b3f)

    # strip batch / output-column padding
    return out[:batch, :out_dim]


def init_feature_params(key, input_dim, output_dim, hidden_dim=128):
    """Deterministic init mimicking PyTorch nn.Linear default U(-1/sqrt(fan_in), +)."""
    ks = jax.random.split(key, 6)

    def linear(kw, kb, fan_in, fan_out):
        bound = 1.0 / jnp.sqrt(jnp.float32(fan_in))
        # stored as (in, out): equivalent to PyTorch weight.T
        w = jax.random.uniform(kw, (fan_in, fan_out), jnp.float32, -bound, bound)
        b = jax.random.uniform(kb, (1, fan_out), jnp.float32, -bound, bound)
        return w, b

    w1, b1 = linear(ks[0], ks[1], input_dim, hidden_dim)
    w2, b2 = linear(ks[2], ks[3], hidden_dim, hidden_dim)
    w3, b3 = linear(ks[4], ks[5], hidden_dim, output_dim)
    return w1, b1, w2, b2, w3, b3


if __name__ == "__main__":
    key = jax.random.PRNGKey(0)
    k_x, k_p = jax.random.split(key)

    batch = 8
    input_dim = 16
    hidden_dim = 128
    output_dim = 32

    x = jax.random.normal(k_x, (batch, input_dim), jnp.float32)
    params = init_feature_params(k_p, input_dim, output_dim, hidden_dim)

    out = feature_forward(x, *params)
    jax.block_until_ready(out)

    # reference check (plain f32 JAX); kernel uses bf16 MXU operands with f32
    # accumulation, so use a bf16-appropriate tolerance.
    w1, b1, w2, b2, w3, b3 = params
    ref = jnp.maximum(x @ w1 + b1, 0.0)
    ref = jnp.maximum(ref @ w2 + b2, 0.0)
    ref = ref @ w3 + b3

    assert out.shape == (batch, output_dim)
    assert jnp.allclose(out, ref, atol=3e-2, rtol=3e-2), (
        float(jnp.max(jnp.abs(out - ref))))

    print("KERNEL_OK")
</pallas_src>

<mosaic_0001>
module attributes {stable_mosaic.version = 11 : i64} {
  func.func @_feature_kernel(%arg0: i32, %arg1: memref<128x16xbf16, #tpu.memory_space<vmem>>, %arg2: memref<16x128xbf16, #tpu.memory_space<vmem>>, %arg3: memref<1x128xf32, #tpu.memory_space<vmem>>, %arg4: memref<128x128xbf16, #tpu.memory_space<vmem>>, %arg5: memref<1x128xf32, #tpu.memory_space<vmem>>, %arg6: memref<128x128xbf16, #tpu.memory_space<vmem>>, %arg7: memref<1x128xf32, #tpu.memory_space<vmem>>, %arg8: memref<128x128xf32, #tpu.memory_space<vmem>>) attributes {dimension_semantics = [#tpu.dimension_semantics<parallel>], iteration_bounds = array<i64: 1>, scalar_prefetch = 0 : i64, scratch_operands = 0 : i64, tpu.core_type = #tpu.core_type<tc>, window_params = [{transform_indices = @transform_0, window_bounds = array<i64: 128, 16>}, {pipeline_mode = #tpu.pipeline_mode<synchronous>, transform_indices = @transform_1, window_bounds = array<i64: 16, 128>}, {pipeline_mode = #tpu.pipeline_mode<synchronous>, transform_indices = @transform_2, window_bounds = array<i64: 1, 128>}, {pipeline_mode = #tpu.pipeline_mode<synchronous>, transform_indices = @transform_3, window_bounds = array<i64: 128, 128>}, {pipeline_mode = #tpu.pipeline_mode<synchronous>, transform_indices = @transform_4, window_bounds = array<i64: 1, 128>}, {pipeline_mode = #tpu.pipeline_mode<synchronous>, transform_indices = @transform_5, window_bounds = array<i64: 128, 128>}, {pipeline_mode = #tpu.pipeline_mode<synchronous>, transform_indices = @transform_6, window_bounds = array<i64: 1, 128>}, {transform_indices = @transform_7, window_bounds = array<i64: 128, 128>}]} {
    %c0 = arith.constant 0 : index
    %c0_0 = arith.constant 0 : index
    %0 = vector.load %arg1[%c0, %c0_0] : memref<128x16xbf16, #tpu.memory_space<vmem>>, vector<128x16xbf16>
    %c0_1 = arith.constant 0 : index
    %c0_2 = arith.constant 0 : index
    %1 = vector.load %arg2[%c0_1, %c0_2] : memref<16x128xbf16, #tpu.memory_space<vmem>>, vector<16x128xbf16>
    %cst = arith.constant dense<0.000000e+00> : vector<128x128xf32>
    %2 = tpu.matmul %0, %1, %cst {dimension_numbers = #tpu.dot_dimension_numbers<[1], [0], [0], [1], [0, 0, 1, 1], [], []>} : vector<128x16xbf16>, vector<16x128xbf16>, vector<128x128xf32> -> vector<128x128xf32>
    %c0_3 = arith.constant 0 : index
    %c0_4 = arith.constant 0 : index
    %3 = vector.load %arg3[%c0_3, %c0_4] : memref<1x128xf32, #tpu.memory_space<vmem>>, vector<1x128xf32>
    %4 = vector.broadcast %3 : vector<1x128xf32> to vector<128x128xf32>
    %5 = arith.addf %2, %4 : vector<128x128xf32>
    %cst_5 = arith.constant 0.000000e+00 : f32
    %6 = vector.broadcast %cst_5 : f32 to vector<128x128xf32>
    %7 = arith.maximumf %5, %6 : vector<128x128xf32>
    %8 = arith.truncf %7 : vector<128x128xf32> to vector<128x128xbf16>
    %c0_6 = arith.constant 0 : index
    %c0_7 = arith.constant 0 : index
    %9 = vector.load %arg4[%c0_6, %c0_7] : memref<128x128xbf16, #tpu.memory_space<vmem>>, vector<128x128xbf16>
    %cst_8 = arith.constant dense<0.000000e+00> : vector<128x128xf32>
    %10 = tpu.matmul %8, %9, %cst_8 {dimension_numbers = #tpu.dot_dimension_numbers<[1], [0], [0], [1], [0, 0, 1, 1], [], []>} : vector<128x128xbf16>, vector<128x128xbf16>, vector<128x128xf32> -> vector<128x128xf32>
    %c0_9 = arith.constant 0 : index
    %c0_10 = arith.constant 0 : index
    %11 = vector.load %arg5[%c0_9, %c0_10] : memref<1x128xf32, #tpu.memory_space<vmem>>, vector<1x128xf32>
    %12 = vector.broadcast %11 : vector<1x128xf32> to vector<128x128xf32>
    %13 = arith.addf %10, %12 : vector<128x128xf32>
    %cst_11 = arith.constant 0.000000e+00 : f32
    %14 = vector.broadcast %cst_11 : f32 to vector<128x128xf32>
    %15 = arith.maximumf %13, %14 : vector<128x128xf32>
    %16 = arith.truncf %15 : vector<128x128xf32> to vector<128x128xbf16>
    %c0_12 = arith.constant 0 : index
    %c0_13 = arith.constant 0 : index
    %17 = vector.load %arg6[%c0_12, %c0_13] : memref<128x128xbf16, #tpu.memory_space<vmem>>, vector<128x128xbf16>
    %cst_14 = arith.constant dense<0.000000e+00> : vector<128x128xf32>
    %18 = tpu.matmul %16, %17, %cst_14 {dimension_numbers = #tpu.dot_dimension_numbers<[1], [0], [0], [1], [0, 0, 1, 1], [], []>} : vector<128x128xbf16>, vector<128x128xbf16>, vector<128x128xf32> -> vector<128x128xf32>
    %c0_15 = arith.constant 0 : index
    %c0_16 = arith.constant 0 : index
    %19 = vector.load %arg7[%c0_15, %c0_16] : memref<1x128xf32, #tpu.memory_space<vmem>>, vector<1x128xf32>
    %20 = vector.broadcast %19 : vector<1x128xf32> to vector<128x128xf32>
    %21 = arith.addf %18, %20 : vector<128x128xf32>
    %c0_17 = arith.constant 0 : index
    %c0_18 = arith.constant 0 : index
    %22 = vector.load %arg8[%c0_17, %c0_18] : memref<128x128xf32, #tpu.memory_space<vmem>>, vector<128x128xf32>
    tpu.vector_store %arg8[%c0_17, %c0_18], %21 {strides = array<i32>} : memref<128x128xf32, #tpu.memory_space<vmem>>, vector<128x128xf32>,
    return
  }
  func.func @transform_0(%arg0: i32) -> (i32, i32) {
    %c0_i32 = arith.constant 0 : i32
    %c0_i32_0 = arith.constant 0 : i32
    return %arg0, %c0_i32 : i32, i32
  }
  func.func @transform_1(%arg0: i32) -> (i32, i32) {
    %c0_i32 = arith.constant 0 : i32
    %c0_i32_0 = arith.constant 0 : i32
    %c0_i32_1 = arith.constant 0 : i32
    return %c0_i32, %c0_i32_0 : i32, i32
  }
  func.func @transform_2(%arg0: i32) -> (i32, i32) {
    %c0_i32 = arith.constant 0 : i32
    %c0_i32_0 = arith.constant 0 : i32
    %c0_i32_1 = arith.constant 0 : i32
    return %c0_i32, %c0_i32_0 : i32, i32
  }
  func.func @transform_3(%arg0: i32) -> (i32, i32) {
    %c0_i32 = arith.constant 0 : i32
    %c0_i32_0 = arith.constant 0 : i32
    %c0_i32_1 = arith.constant 0 : i32
    return %c0_i32, %c0_i32_0 : i32, i32
  }
  func.func @transform_4(%arg0: i32) -> (i32, i32) {
    %c0_i32 = arith.constant 0 : i32
    %c0_i32_0 = arith.constant 0 : i32
    %c0_i32_1 = arith.constant 0 : i32
    return %c0_i32, %c0_i32_0 : i32, i32
  }
  func.func @transform_5(%arg0: i32) -> (i32, i32) {
    %c0_i32 = arith.constant 0 : i32
    %c0_i32_0 = arith.constant 0 : i32
    %c0_i32_1 = arith.constant 0 : i32
    return %c0_i32, %c0_i32_0 : i32, i32
  }
  func.func @transform_6(%arg0: i32) -> (i32, i32) {
    %c0_i32 = arith.constant 0 : i32
    %c0_i32_0 = arith.constant 0 : i32
    %c0_i32_1 = arith.constant 0 : i32
    return %c0_i32, %c0_i32_0 : i32, i32
  }
  func.func @transform_7(%arg0: i32) -> (i32, i32) {
    %c0_i32 = arith.constant 0 : i32
    %c0_i32_0 = arith.constant 0 : i32
    return %arg0, %c0_i32 : i32, i32
  }
}

</mosaic_0001>

<llo_original>
// kernel: feature_forward.1
$region0: #{feature_forward.1}
  #allocation0 [shape = 'u32[]', space=smem, size = 0x4, offset = 0x4, fixed_abs, tag = 'smem constant byte address 0x4 - core index']
  #allocation1 [shape = 'u32[72,128]{1,0:T(1,128)}', space=vmem, size = 0x9000, scoped, tag = 'internal scratch']
  %s0 = inlined_call_operand.vmem [shape: bf16[128,16], index: 0, kind: input, shape index: {}]
  %s1 = inlined_call_operand.vmem [shape: bf16[16,128], index: 1, kind: input, shape index: {}]
  %s2 = inlined_call_operand.vmem [shape: f32[1,128], index: 2, kind: input, shape index: {}]
  %s3 = inlined_call_operand.vmem [shape: bf16[128,128], index: 3, kind: input, shape index: {}]
  %s4 = inlined_call_operand.vmem [shape: f32[1,128], index: 4, kind: input, shape index: {}]
  %s5 = inlined_call_operand.vmem [shape: bf16[128,128], index: 5, kind: input, shape index: {}]
  %s6 = inlined_call_operand.vmem [shape: f32[1,128], index: 6, kind: input, shape index: {}]
  %s7 = inlined_call_operand.vmem [shape: f32[128,128], index: 7, kind: output, shape index: {}]
  %s8 = sld [smem:[#allocation0]]
  $region38: #{feature_forward.1} parent=0
    _
  %s10 = ssub.s32 1, %s8
  %s11 = scalar_select 0, %s10, %s8
  // Predicated region
  $region2: #{feature_forward.1} parent=0 // pred_check
    _
  $region3: #{feature_forward.1} parent=0 // pred_check_branch
    %13 = sbr.rel (0) target = $region5
  $region4: #{feature_forward.1} parent=0 // pred_region
    _
  $region5: #{feature_forward.1} parent=0 // pred_fallthru
    _
  // Predicated region
  $region6: #{feature_forward.1} parent=0 // pred_check
    _
  $region7: #{feature_forward.1} parent=0 // pred_check_branch
    %15 = sbr.rel (0) target = $region9
  $region8: #{feature_forward.1} parent=0 // pred_region
    _
  $region9: #{feature_forward.1} parent=0 // pred_fallthru
    _
  // Predicated region
  $region10: #{feature_forward.1} parent=0 // pred_check
    _
  $region11: #{feature_forward.1} parent=0 // pred_check_branch
    %17 = sbr.rel (0) target = $region13
  $region12: #{feature_forward.1} parent=0 // pred_region
    _
  $region13: #{feature_forward.1} parent=0 // pred_fallthru
    _
  // Predicated region
  $region14: #{feature_forward.1} parent=0 // pred_check
    _
  $region15: #{feature_forward.1} parent=0 // pred_check_branch
    %19 = sbr.rel (0) target = $region17
  $region16: #{feature_forward.1} parent=0 // pred_region
    _
  $region17: #{feature_forward.1} parent=0 // pred_fallthru
    _
  // Predicated region
  $region18: #{feature_forward.1} parent=0 // pred_check
    _
  $region19: #{feature_forward.1} parent=0 // pred_check_branch
    %21 = sbr.rel (0) target = $region21
  $region20: #{feature_forward.1} parent=0 // pred_region
    _
  $region21: #{feature_forward.1} parent=0 // pred_fallthru
    _
  // Predicated region
  $region22: #{feature_forward.1} parent=0 // pred_check
    _
  $region23: #{feature_forward.1} parent=0 // pred_check_branch
    %23 = sbr.rel (0) target = $region25
  $region24: #{feature_forward.1} parent=0 // pred_region
    _
  $region25: #{feature_forward.1} parent=0 // pred_fallthru
    _
  // Predicated region
  $region26: #{feature_forward.1} parent=0 // pred_check
    _
  $region27: #{feature_forward.1} parent=0 // pred_check_branch
    %25 = sbr.rel (0) target = $region29
  $region28: #{feature_forward.1} parent=0 // pred_region
    _
  $region29: #{feature_forward.1} parent=0 // pred_fallthru
    _
  %v27 = vld [vmem:[%s0] sm:$0xf]
  %v28 = vld [vmem:[%s0 + $0x4] sm:$0xf]
  %v29 = vld [vmem:[%s0 + $0x8] sm:$0xf]
  %v30 = vld [vmem:[%s0 + $0xc] sm:$0xf]
  %v31 = vld [vmem:[%s0 + $0x10] sm:$0xf]
  %v32 = vld [vmem:[%s0 + $0x14] sm:$0xf]
  %v33 = vld [vmem:[%s0 + $0x18] sm:$0xf]
  %v34 = vld [vmem:[%s0 + $0x1c] sm:$0xf]
  %v35 = vld [vmem:[%s0 + $0x20] sm:$0xf]
  %v36 = vld [vmem:[%s0 + $0x24] sm:$0xf]
  %v37 = vld [vmem:[%s0 + $0x28] sm:$0xf]
  %v38 = vld [vmem:[%s0 + $0x2c] sm:$0xf]
  %v39 = vld [vmem:[%s0 + $0x30] sm:$0xf]
  %v40 = vld [vmem:[%s0 + $0x34] sm:$0xf]
  %v41 = vld [vmem:[%s0 + $0x38] sm:$0xf]
  %v42 = vld [vmem:[%s0 + $0x3c] sm:$0xf]
  %v43 = vld [vmem:[%s1] sm:$0xf]
  %v44 = vld [vmem:[%s1 + $0x4] sm:$0xf]
  %v45 = vld [vmem:[%s2] sm:$0x1]
  %v47 = vperm.slane %v45, 0
  %v65 = vunpack.c.l.b16 %v27
  %v66 = vunpack.c.l.b16 %v28
  %v67 = vunpack.c.l.b16 %v29
  %v68 = vunpack.c.l.b16 %v30
  %v69 = vunpack.c.l.b16 %v31
  %v70 = vunpack.c.l.b16 %v32
  %v71 = vunpack.c.l.b16 %v33
  %v72 = vunpack.c.l.b16 %v34
  %v73 = vunpack.c.l.b16 %v35
  %v74 = vunpack.c.l.b16 %v36
  %v75 = vunpack.c.l.b16 %v37
  %v76 = vunpack.c.l.b16 %v38
  %v77 = vunpack.c.l.b16 %v39
  %v78 = vunpack.c.l.b16 %v40
  %v79 = vunpack.c.l.b16 %v41
  %v80 = vunpack.c.l.b16 %v42
  %v81 = vpack.c.b16 %v66, %v65
  %v82 = vpack.c.b16 %v68, %v67
  %v83 = vpack.c.b16 %v70, %v69
  %v84 = vpack.c.b16 %v72, %v71
  %v85 = vpack.c.b16 %v74, %v73
  %v86 = vpack.c.b16 %v76, %v75
  %v87 = vpack.c.b16 %v78, %v77
  %v88 = vpack.c.b16 %v80, %v79
  %v91 = vunpack.c.l.b16 %v43
  %v92 = vunpack.c.l.b16 %v44
  %v93 = vpack.c.b16 %v92, %v91
  %vm95 = vcmask 130048
  %v97 = vsel %vm95, %v81, 0
  %v100 = vsel %vm95, %v82, 0
  %v103 = vsel %vm95, %v83, 0
  %v106 = vsel %vm95, %v84, 0
  %v109 = vsel %vm95, %v85, 0
  %v112 = vsel %vm95, %v86, 0
  %v115 = vsel %vm95, %v87, 0
  %v118 = vsel %vm95, %v88, 0
  %120 = vmatpush.bf16.msra.mxu0 0
  %121 = vmatpush.bf16.msra.mxu0 0
  %122 = vmatpush.bf16.msra.mxu0 0
  %123 = vmatpush.bf16.msra.mxu0 0
  %124 = vmatpush.bf16.msra.mxu0 0
  %125 = vmatpush.bf16.msra.mxu0 0
  %126 = vmatpush.bf16.msra.mxu0 0
  %127 = vmatpush.bf16.msra.mxu0 %v93
  %128 = vmatmul.bf16.gmra.mxu0 %v97
  %v129 = vpop.f32.mrf.mxu0
  %v130 = vadd.f32 %v47, %v129
  %v131 = vpop.f32.mrf.mxu0
  %v132 = vadd.f32 %v47, %v131
  %133 = vmatmul.bf16.gmra.mxu0 %v100
  %v134 = vpop.f32.mrf.mxu0
  %v135 = vadd.f32 %v47, %v134
  %v136 = vpop.f32.mrf.mxu0
  %v137 = vadd.f32 %v47, %v136
  %138 = vmatmul.bf16.gmra.mxu0 %v103
  %v139 = vpop.f32.mrf.mxu0
  %v140 = vadd.f32 %v47, %v139
  %v141 = vpop.f32.mrf.mxu0
  %v142 = vadd.f32 %v47, %v141
  %143 = vmatmul.bf16.gmra.mxu0 %v106
  %v144 = vpop.f32.mrf.mxu0
  %v145 = vadd.f32 %v47, %v144
  %v146 = vpop.f32.mrf.mxu0
  %v147 = vadd.f32 %v47, %v146
  %148 = vmatmul.bf16.gmra.mxu0 %v109
  %v149 = vpop.f32.mrf.mxu0
  %v150 = vadd.f32 %v47, %v149
  %v151 = vpop.f32.mrf.mxu0
  %v152 = vadd.f32 %v47, %v151
  %153 = vmatmul.bf16.gmra.mxu0 %v112
  %v154 = vpop.f32.mrf.mxu0
  %v155 = vadd.f32 %v47, %v154
  %v156 = vpop.f32.mrf.mxu0
  %v157 = vadd.f32 %v47, %v156
  %158 = vmatmul.bf16.gmra.mxu0 %v115
  %v159 = vpop.f32.mrf.mxu0
  %v160 = vadd.f32 %v47, %v159
  %v161 = vpop.f32.mrf.mxu0
  %v162 = vadd.f32 %v47, %v161
  %163 = vmatmul.bf16.gmra.mxu0 %v118
  %v164 = vpop.f32.mrf.mxu0
  %v165 = vadd.f32 %v47, %v164
  %v166 = vpop.f32.mrf.mxu0
  %v167 = vadd.f32 %v47, %v166
  %168 = vdwg.mxu0
  %v169 = vmax.f32 %v130, 0.0
  %v170 = vmax.f32 %v132, 0.0
  %v171 = vmax.f32 %v135, 0.0
  %v172 = vmax.f32 %v137, 0.0
  %v173 = vmax.f32 %v140, 0.0
  %v174 = vmax.f32 %v142, 0.0
  %v175 = vmax.f32 %v145, 0.0
  %v176 = vmax.f32 %v147, 0.0
  %v177 = vmax.f32 %v150, 0.0
  %v178 = vmax.f32 %v152, 0.0
  %v179 = vmax.f32 %v155, 0.0
  %v180 = vmax.f32 %v157, 0.0
  %v181 = vmax.f32 %v160, 0.0
  %v182 = vmax.f32 %v162, 0.0
  %v183 = vmax.f32 %v165, 0.0
  %v184 = vmax.f32 %v167, 0.0
  %v185 = vpack.c.bf16 %v170, %v169
  %v186 = vpack.c.bf16 %v172, %v171
  %v187 = vpack.c.bf16 %v174, %v173
  %v188 = vpack.c.bf16 %v176, %v175
  %v189 = vpack.c.bf16 %v178, %v177
  %v190 = vpack.c.bf16 %v180, %v179
  %v191 = vpack.c.bf16 %v182, %v181
  %v192 = vpack.c.bf16 %v184, %v183
  %v193 = vld [vmem:[%s3] sm:$0xf]
  %v194 = vld [vmem:[%s3 + $0x4] sm:$0xf]
  %v195 = vld [vmem:[%s3 + $0x8] sm:$0xf]
  %v196 = vld [vmem:[%s3 + $0xc] sm:$0xf]
  %v197 = vld [vmem:[%s3 + $0x10] sm:$0xf]
  %v198 = vld [vmem:[%s3 + $0x14] sm:$0xf]
  %v199 = vld [vmem:[%s3 + $0x18] sm:$0xf]
  %v200 = vld [vmem:[%s3 + $0x1c] sm:$0xf]
  %v201 = vld [vmem:[%s3 + $0x20] sm:$0xf]
  %v202 = vld [vmem:[%s3 + $0x24] sm:$0xf]
  %v203 = vld [vmem:[%s3 + $0x28] sm:$0xf]
  %v204 = vld [vmem:[%s3 + $0x2c] sm:$0xf]
  %v205 = vld [vmem:[%s3 + $0x30] sm:$0xf]
  %v206 = vld [vmem:[%s3 + $0x34] sm:$0xf]
  %v207 = vld [vmem:[%s3 + $0x38] sm:$0xf]
  %v208 = vld [vmem:[%s3 + $0x3c] sm:$0xf]
  %v209 = vld [vmem:[%s4] sm:$0x1]
  %v211 = vperm.slane %v209, 0
  %v229 = vunpack.c.l.b16 %v193
  %v230 = vunpack.c.l.b16 %v194
  %v231 = vunpack.c.l.b16 %v195
  %v232 = vunpack.c.l.b16 %v196
  %v233 = vunpack.c.l.b16 %v197
  %v234 = vunpack.c.l.b16 %v198
  %v235 = vunpack.c.l.b16 %v199
  %v236 = vunpack.c.l.b16 %v200
  %v237 = vunpack.c.l.b16 %v201
  %v238 = vunpack.c.l.b16 %v202
  %v239 = vunpack.c.l.b16 %v203
  %v240 = vunpack.c.l.b16 %v204
  %v241 = vunpack.c.l.b16 %v205
  %v242 = vunpack.c.l.b16 %v206
  %v243 = vunpack.c.l.b16 %v207
  %v244 = vunpack.c.l.b16 %v208
  %v245 = vpack.c.b16 %v230, %v229
  %v246 = vpack.c.b16 %v232, %v231
  %v247 = vpack.c.b16 %v234, %v233
  %v248 = vpack.c.b16 %v236, %v235
  %v249 = vpack.c.b16 %v238, %v237
  %v250 = vpack.c.b16 %v240, %v239
  %v251 = vpack.c.b16 %v242, %v241
  %v252 = vpack.c.b16 %v244, %v243
  %261 = vmatpush.bf16.msra.mxu0 %v252
  %262 = vmatpush.bf16.msra.mxu0 %v251
  %263 = vmatpush.bf16.msra.mxu0 %v250
  %264 = vmatpush.bf16.msra.mxu0 %v249
  %265 = vmatpush.bf16.msra.mxu0 %v248
  %266 = vmatpush.bf16.msra.mxu0 %v247
  %267 = vmatpush.bf16.msra.mxu0 %v246
  %268 = vmatpush.bf16.msra.mxu0 %v245
  %269 = vmatmul.bf16.gmra.mxu0 %v185
  %v270 = vpop.f32.mrf.mxu0
  %v271 = vadd.f32 %v211, %v270
  %v272 = vpop.f32.mrf.mxu0
  %v273 = vadd.f32 %v211, %v272
  %274 = vmatmul.bf16.gmra.mxu0 %v186
  %v275 = vpop.f32.mrf.mxu0
  %v276 = vadd.f32 %v211, %v275
  %v277 = vpop.f32.mrf.mxu0
  %v278 = vadd.f32 %v211, %v277
  %279 = vmatmul.bf16.gmra.mxu0 %v187
  %v280 = vpop.f32.mrf.mxu0
  %v281 = vadd.f32 %v211, %v280
  %v282 = vpop.f32.mrf.mxu0
  %v283 = vadd.f32 %v211, %v282
  %284 = vmatmul.bf16.gmra.mxu0 %v188
  %v285 = vpop.f32.mrf.mxu0
  %v286 = vadd.f32 %v211, %v285
  %v287 = vpop.f32.mrf.mxu0
  %v288 = vadd.f32 %v211, %v287
  %289 = vmatmul.bf16.gmra.mxu0 %v189
  %v290 = vpop.f32.mrf.mxu0
  %v291 = vadd.f32 %v211, %v290
  %v292 = vpop.f32.mrf.mxu0
  %v293 = vadd.f32 %v211, %v292
  %294 = vmatmul.bf16.gmra.mxu0 %v190
  %v295 = vpop.f32.mrf.mxu0
  %v296 = vadd.f32 %v211, %v295
  %v297 = vpop.f32.mrf.mxu0
  %v298 = vadd.f32 %v211, %v297
  %299 = vmatmul.bf16.gmra.mxu0 %v191
  %v300 = vpop.f32.mrf.mxu0
  %v301 = vadd.f32 %v211, %v300
  %v302 = vpop.f32.mrf.mxu0
  %v303 = vadd.f32 %v211, %v302
  %304 = vmatmul.bf16.gmra.mxu0 %v192
  %v305 = vpop.f32.mrf.mxu0
  %v306 = vadd.f32 %v211, %v305
  %v307 = vpop.f32.mrf.mxu0
  %v308 = vadd.f32 %v211, %v307
  %309 = vdwg.mxu0
  %v310 = vmax.f32 %v271, 0.0
  %v311 = vmax.f32 %v273, 0.0
  %v312 = vmax.f32 %v276, 0.0
  %v313 = vmax.f32 %v278, 0.0
  %v314 = vmax.f32 %v281, 0.0
  %v315 = vmax.f32 %v283, 0.0
  %v316 = vmax.f32 %v286, 0.0
  %v317 = vmax.f32 %v288, 0.0
  %v318 = vmax.f32 %v291, 0.0
  %v319 = vmax.f32 %v293, 0.0
  %v320 = vmax.f32 %v296, 0.0
  %v321 = vmax.f32 %v298, 0.0
  %v322 = vmax.f32 %v301, 0.0
  %v323 = vmax.f32 %v303, 0.0
  %v324 = vmax.f32 %v306, 0.0
  %v325 = vmax.f32 %v308, 0.0
  %v326 = vpack.c.bf16 %v311, %v310
  %v327 = vpack.c.bf16 %v313, %v312
  %v328 = vpack.c.bf16 %v315, %v314
  %v329 = vpack.c.bf16 %v317, %v316
  %v330 = vpack.c.bf16 %v319, %v318
  %v331 = vpack.c.bf16 %v321, %v320
  %v332 = vpack.c.bf16 %v323, %v322
  %v333 = vpack.c.bf16 %v325, %v324
  %v334 = vld [vmem:[%s5] sm:$0xf]
  %v335 = vld [vmem:[%s5 + $0x4] sm:$0xf]
  %v336 = vld [vmem:[%s5 + $0x8] sm:$0xf]
  %v337 = vld [vmem:[%s5 + $0xc] sm:$0xf]
  %v338 = vld [vmem:[%s5 + $0x10] sm:$0xf]
  %v339 = vld [vmem:[%s5 + $0x14] sm:$0xf]
  %v340 = vld [vmem:[%s5 + $0x18] sm:$0xf]
  %v341 = vld [vmem:[%s5 + $0x1c] sm:$0xf]
  %v342 = vld [vmem:[%s5 + $0x20] sm:$0xf]
  %v343 = vld [vmem:[%s5 + $0x24] sm:$0xf]
  %v344 = vld [vmem:[%s5 + $0x28] sm:$0xf]
  %v345 = vld [vmem:[%s5 + $0x2c] sm:$0xf]
  %v346 = vld [vmem:[%s5 + $0x30] sm:$0xf]
  %v347 = vld [vmem:[%s5 + $0x34] sm:$0xf]
  %v348 = vld [vmem:[%s5 + $0x38] sm:$0xf]
  %v349 = vld [vmem:[%s5 + $0x3c] sm:$0xf]
  %v350 = vld [vmem:[%s6] sm:$0x1]
  %v352 = vperm.slane %v350, 0
  %v370 = vunpack.c.l.b16 %v334
  %v371 = vunpack.c.l.b16 %v335
  %v372 = vunpack.c.l.b16 %v336
  %v373 = vunpack.c.l.b16 %v337
  %v374 = vunpack.c.l.b16 %v338
  %v375 = vunpack.c.l.b16 %v339
  %v376 = vunpack.c.l.b16 %v340
  %v377 = vunpack.c.l.b16 %v341
  %v378 = vunpack.c.l.b16 %v342
  %v379 = vunpack.c.l.b16 %v343
  %v380 = vunpack.c.l.b16 %v344
  %v381 = vunpack.c.l.b16 %v345
  %v382 = vunpack.c.l.b16 %v346
  %v383 = vunpack.c.l.b16 %v347
  %v384 = vunpack.c.l.b16 %v348
  %v385 = vunpack.c.l.b16 %v349
  %v386 = vpack.c.b16 %v371, %v370
  %v387 = vpack.c.b16 %v373, %v372
  %v388 = vpack.c.b16 %v375, %v374
  %v389 = vpack.c.b16 %v377, %v376
  %v390 = vpack.c.b16 %v379, %v378
  %v391 = vpack.c.b16 %v381, %v380
  %v392 = vpack.c.b16 %v383, %v382
  %v393 = vpack.c.b16 %v385, %v384
  %402 = vmatpush.bf16.msra.mxu0 %v393
  %403 = vmatpush.bf16.msra.mxu0 %v392
  %404 = vmatpush.bf16.msra.mxu0 %v391
  %405 = vmatpush.bf16.msra.mxu0 %v390
  %406 = vmatpush.bf16.msra.mxu0 %v389
  %407 = vmatpush.bf16.msra.mxu0 %v388
  %408 = vmatpush.bf16.msra.mxu0 %v387
  %409 = vmatpush.bf16.msra.mxu0 %v386
  %410 = vmatmul.bf16.gmra.mxu0 %v326
  %v411 = vpop.f32.mrf.mxu0
  %v412 = vadd.f32 %v352, %v411
  %v413 = vpop.f32.mrf.mxu0
  %v414 = vadd.f32 %v352, %v413
  %415 = vmatmul.bf16.gmra.mxu0 %v327
  %v416 = vpop.f32.mrf.mxu0
  %v417 = vadd.f32 %v352, %v416
  %v418 = vpop.f32.mrf.mxu0
  %v419 = vadd.f32 %v352, %v418
  %420 = vmatmul.bf16.gmra.mxu0 %v328
  %v421 = vpop.f32.mrf.mxu0
  %v422 = vadd.f32 %v352, %v421
  %v423 = vpop.f32.mrf.mxu0
  %v424 = vadd.f32 %v352, %v423
  %425 = vmatmul.bf16.gmra.mxu0 %v329
  %v426 = vpop.f32.mrf.mxu0
  %v427 = vadd.f32 %v352, %v426
  %v428 = vpop.f32.mrf.mxu0
  %v429 = vadd.f32 %v352, %v428
  %430 = vmatmul.bf16.gmra.mxu0 %v330
  %v431 = vpop.f32.mrf.mxu0
  %v432 = vadd.f32 %v352, %v431
  %v433 = vpop.f32.mrf.mxu0
  %v434 = vadd.f32 %v352, %v433
  %435 = vmatmul.bf16.gmra.mxu0 %v331
  %v436 = vpop.f32.mrf.mxu0
  %v437 = vadd.f32 %v352, %v436
  %v438 = vpop.f32.mrf.mxu0
  %v439 = vadd.f32 %v352, %v438
  %440 = vmatmul.bf16.gmra.mxu0 %v332
  %v441 = vpop.f32.mrf.mxu0
  %v442 = vadd.f32 %v352, %v441
  %v443 = vpop.f32.mrf.mxu0
  %v444 = vadd.f32 %v352, %v443
  %445 = vmatmul.bf16.gmra.mxu0 %v333
  %v446 = vpop.f32.mrf.mxu0
  %v447 = vadd.f32 %v352, %v446
  %v448 = vpop.f32.mrf.mxu0
  %v449 = vadd.f32 %v352, %v448
  %450 = vdwg.mxu0
  %451 = vst [vmem:[%s7] sm:$0xff] %v412
  %452 = vst [vmem:[%s7 + $0x8] sm:$0xff] %v414
  %453 = vst [vmem:[%s7 + $0x10] sm:$0xff] %v417
  %454 = vst [vmem:[%s7 + $0x18] sm:$0xff] %v419
  %455 = vst [vmem:[%s7 + $0x20] sm:$0xff] %v422
  %456 = vst [vmem:[%s7 + $0x28] sm:$0xff] %v424
  %457 = vst [vmem:[%s7 + $0x30] sm:$0xff] %v427
  %458 = vst [vmem:[%s7 + $0x38] sm:$0xff] %v429
  %459 = vst [vmem:[%s7 + $0x40] sm:$0xff] %v432
  %460 = vst [vmem:[%s7 + $0x48] sm:$0xff] %v434
  %461 = vst [vmem:[%s7 + $0x50] sm:$0xff] %v437
  %462 = vst [vmem:[%s7 + $0x58] sm:$0xff] %v439
  %463 = vst [vmem:[%s7 + $0x60] sm:$0xff] %v442
  %464 = vst [vmem:[%s7 + $0x68] sm:$0xff] %v444
  %465 = vst [vmem:[%s7 + $0x70] sm:$0xff] %v447
  %466 = vst [vmem:[%s7 + $0x78] sm:$0xff] %v449
  // Predicated region
  $region30: #{feature_forward.1} parent=0 // pred_check
    _
  $region31: #{feature_forward.1} parent=0 // pred_check_branch
    %468 = sbr.rel (0) target = $region33
  $region32: #{feature_forward.1} parent=0 // pred_region
    _
  $region33: #{feature_forward.1} parent=0 // pred_fallthru
    _
  // Predicated region
  $region34: #{feature_forward.1} parent=0 // pred_check
    _
  $region35: #{feature_forward.1} parent=0 // pred_check_branch
    %470 = sbr.rel (0) target = $region37
  $region36: #{feature_forward.1} parent=0 // pred_region
    _
  $region37: #{feature_forward.1} parent=0 // pred_fallthru
    _

</llo_original>
